<compile_context>
chip_gen: v7x
topology: tpu7x:2x2x1
jax: 0.10.0
libtpu: 0.0.40
codegen_flags: <defaults>
</compile_context>

<pallas_src>
import jax
import jax.numpy as jnp
from jax.experimental import pallas as pl
from jax.experimental.pallas import tpu as pltpu


def _audio_head_kernel(x_ref, w_ref, b_ref, o_ref):
    # x_ref: (rt, D)     flattened audio-query rows for this tile
    # w_ref: (D, N_pad)  padded, pre-transposed weight (bf16), VMEM-resident
    # b_ref: (1, N_pad)  padded bias (f32), VMEM-resident
    # o_ref: (rt, N_pad) lane-dense output tile
    x = x_ref[...].astype(w_ref.dtype)                     # bf16 MXU inputs
    acc = jnp.dot(x, w_ref[...], preferred_element_type=jnp.float32)
    o_ref[...] = (acc + b_ref[...]).astype(o_ref.dtype)    # f32 bias add


def _pick_row_tile(M_pad, D, N_pad, x_itemsize, out_itemsize,
                   vmem_budget_bytes=10 << 20, row_cap=512):
    """Largest multiple-of-8 row tile dividing M_pad that keeps the
    double-buffered x and output tiles inside a VMEM budget that is safe even
    on v7x (the weight/bias blocks have constant index maps and stay
    resident)."""
    per_row = 2 * (D * x_itemsize + N_pad * out_itemsize)  # dbl-buffered in+out
    by_vmem = max(8, (vmem_budget_bytes // per_row) // 8 * 8)
    cap = max(8, min(M_pad, row_cap, by_vmem))
    rt = 8
    for cand in range(8, cap + 1, 8):
        if M_pad % cand == 0:
            rt = cand
    return rt


def audio_cls_head_forward(x, weight, bias, num_v_queries, num_a_queries,
                           *, compute_dtype=jnp.bfloat16):
    """x: (B, S, d_model); weight: (num_class, d_model); bias: (num_class,)."""
    B, S, D = x.shape
    num_class = weight.shape[0]
    A = int(num_a_queries)
    M = B * A
    N_pad = pl.cdiv(num_class, 128) * 128    # lane-dense output width
    M_pad = pl.cdiv(M, 8) * 8                # sublane-aligned row count

    # One-time parameter prep (in a real model this lives at __init__):
    # pad num_class -> N_pad and pre-transpose to (D, N_pad) in bf16.
    w_pad = jnp.zeros((D, N_pad), compute_dtype).at[:, :num_class].set(
        weight.T.astype(compute_dtype))
    b_pad = jnp.zeros((1, N_pad), jnp.float32).at[:, :num_class].set(
        bias.astype(jnp.float32))

    # Per-call glue: gather only the audio queries and flatten (B, A) -> rows.
    # This keeps the kernel's HBM reads at B*A*D instead of B*S*D and turns
    # the whole head into one dense 2D matmul.
    xa = x[:, S - A:, :].reshape(M, D)
    if M_pad != M:
        xa = jnp.pad(xa, ((0, M_pad - M), (0, 0)))

    rt = _pick_row_tile(M_pad, D, N_pad, x.dtype.itemsize, x.dtype.itemsize)
    grid = (M_pad // rt,)

    flops = 2 * M_pad * D * N_pad
    bytes_accessed = (M_pad * D * x.dtype.itemsize                       # x
                      + D * N_pad * jnp.dtype(compute_dtype).itemsize    # W
                      + N_pad * 4                                        # bias
                      + M_pad * N_pad * x.dtype.itemsize)                # out

    out_pad = pl.pallas_call(
        _audio_head_kernel,
        out_shape=jax.ShapeDtypeStruct((M_pad, N_pad), x.dtype),
        grid_spec=pltpu.PrefetchScalarGridSpec(
            num_scalar_prefetch=0,
            grid=grid,
            in_specs=[
                # x rows: pipelined / double-buffered over the row grid.
                pl.BlockSpec((rt, D), lambda i: (i, 0)),
                # weight / bias: constant block index -> VMEM-resident.
                pl.BlockSpec((D, N_pad), lambda i: (0, 0)),
                pl.BlockSpec((1, N_pad), lambda i: (0, 0)),
            ],
            out_specs=pl.BlockSpec((rt, N_pad), lambda i: (i, 0)),
        ),
        compiler_params=pltpu.CompilerParams(
            dimension_semantics=("parallel",),   # megacore sharding on v7x
        ),
        cost_estimate=pl.CostEstimate(
            flops=flops, transcendentals=0, bytes_accessed=bytes_accessed),
    )(xa, w_pad, b_pad)

    # Drop row/lane padding; rows are already the flattened (B*A) dim.
    a_action_preds = out_pad[:M, :num_class]

    # Mirror the PyTorch return structure.
    return (None, None, None, a_action_preds)


if __name__ == "__main__":
    key = jax.random.PRNGKey(0)
    k_x, k_w, k_b = jax.random.split(key, 3)

    # Small shapes consistent with the module's forward:
    B = 2
    num_v_queries = 5
    num_a_queries = 3
    S = num_v_queries + num_a_queries   # sequence of (visual + audio) queries
    d_model = 32
    num_class = 10

    x = jax.random.normal(k_x, (B, S, d_model), dtype=jnp.float32)
    # Deterministic synthetic parameters for nn.Linear(d_model, num_class):
    weight = jax.random.normal(k_w, (num_class, d_model), dtype=jnp.float32) * 0.02
    bias = jax.random.normal(k_b, (num_class,), dtype=jnp.float32) * 0.02

    _, _, _, a_action_preds = audio_cls_head_forward(
        x, weight, bias, num_v_queries, num_a_queries
    )
    a_action_preds = jax.block_until_ready(a_action_preds)

    # Reference check in plain JAX (f32); kernel uses bf16 MXU inputs with f32
    # accumulation, so compare with a tolerance that covers bf16 rounding.
    ref = (x[:, -num_a_queries:, :] @ weight.T + bias).reshape(
        B * num_a_queries, num_class
    )
    assert a_action_preds.shape == (B * num_a_queries, num_class)
    assert a_action_preds.dtype == x.dtype
    assert jnp.allclose(a_action_preds, ref, atol=1e-2, rtol=1e-2)

    print("KERNEL_OK")
</pallas_src>

<mosaic_0001>
module attributes {stable_mosaic.version = 11 : i64} {
  func.func @_audio_head_kernel(%arg0: i32, %arg1: memref<8x32xf32, #tpu.memory_space<vmem>>, %arg2: memref<32x128xbf16, #tpu.memory_space<vmem>>, %arg3: memref<1x128xf32, #tpu.memory_space<vmem>>, %arg4: memref<8x128xf32, #tpu.memory_space<vmem>>) attributes {dimension_semantics = [#tpu.dimension_semantics<parallel>], iteration_bounds = array<i64: 1>, scalar_prefetch = 0 : i64, scratch_operands = 0 : i64, tpu.core_type = #tpu.core_type<tc>, window_params = [{transform_indices = @transform_0, window_bounds = array<i64: 8, 32>}, {pipeline_mode = #tpu.pipeline_mode<synchronous>, transform_indices = @transform_1, window_bounds = array<i64: 32, 128>}, {pipeline_mode = #tpu.pipeline_mode<synchronous>, transform_indices = @transform_2, window_bounds = array<i64: 1, 128>}, {transform_indices = @transform_3, window_bounds = array<i64: 8, 128>}]} {
    %c0 = arith.constant 0 : index
    %c0_0 = arith.constant 0 : index
    %0 = vector.load %arg1[%c0, %c0_0] : memref<8x32xf32, #tpu.memory_space<vmem>>, vector<8x32xf32>
    %1 = arith.truncf %0 : vector<8x32xf32> to vector<8x32xbf16>
    %c0_1 = arith.constant 0 : index
    %c0_2 = arith.constant 0 : index
    %2 = vector.load %arg2[%c0_1, %c0_2] : memref<32x128xbf16, #tpu.memory_space<vmem>>, vector<32x128xbf16>
    %cst = arith.constant dense<0.000000e+00> : vector<8x128xf32>
    %3 = tpu.matmul %1, %2, %cst {dimension_numbers = #tpu.dot_dimension_numbers<[1], [0], [0], [1], [0, 0, 1, 1], [], []>} : vector<8x32xbf16>, vector<32x128xbf16>, vector<8x128xf32> -> vector<8x128xf32>
    %c0_3 = arith.constant 0 : index
    %c0_4 = arith.constant 0 : index
    %4 = vector.load %arg3[%c0_3, %c0_4] : memref<1x128xf32, #tpu.memory_space<vmem>>, vector<1x128xf32>
    %5 = vector.broadcast %4 : vector<1x128xf32> to vector<8x128xf32>
    %6 = arith.addf %3, %5 : vector<8x128xf32>
    %c0_5 = arith.constant 0 : index
    %c0_6 = arith.constant 0 : index
    %7 = vector.load %arg4[%c0_5, %c0_6] : memref<8x128xf32, #tpu.memory_space<vmem>>, vector<8x128xf32>
    tpu.vector_store %arg4[%c0_5, %c0_6], %6 {strides = array<i32>} : memref<8x128xf32, #tpu.memory_space<vmem>>, vector<8x128xf32>,
    return
  }
  func.func @transform_0(%arg0: i32) -> (i32, i32) {
    %c0_i32 = arith.constant 0 : i32
    %c0_i32_0 = arith.constant 0 : i32
    return %arg0, %c0_i32 : i32, i32
  }
  func.func @transform_1(%arg0: i32) -> (i32, i32) {
    %c0_i32 = arith.constant 0 : i32
    %c0_i32_0 = arith.constant 0 : i32
    %c0_i32_1 = arith.constant 0 : i32
    return %c0_i32, %c0_i32_0 : i32, i32
  }
  func.func @transform_2(%arg0: i32) -> (i32, i32) {
    %c0_i32 = arith.constant 0 : i32
    %c0_i32_0 = arith.constant 0 : i32
    %c0_i32_1 = arith.constant 0 : i32
    return %c0_i32, %c0_i32_0 : i32, i32
  }
  func.func @transform_3(%arg0: i32) -> (i32, i32) {
    %c0_i32 = arith.constant 0 : i32
    %c0_i32_0 = arith.constant 0 : i32
    return %arg0, %c0_i32 : i32, i32
  }
}

</mosaic_0001>

<llo_original>
// kernel: tpu_custom_call.1
$region0: #{tpu_custom_call.1}
  #allocation0 [shape = 'u32[]', space=smem, size = 0x4, offset = 0x4, fixed_abs, tag = 'smem constant byte address 0x4 - core index']
  #allocation1 [shape = 'u32[144,128]{1,0:T(1,128)}', space=vmem, size = 0x12000, scoped, tag = 'internal scratch']
  %s0 = inlined_call_operand.hbm [shape: f32[8,32], index: 0, kind: input, shape index: {}]
  %s1 = inlined_call_operand.hbm [shape: bf16[32,128], index: 1, kind: input, shape index: {}]
  %s2 = inlined_call_operand.vmem [shape: f32[1,128], index: 2, kind: input, shape index: {}]
  %s3 = inlined_call_operand.hbm [shape: f32[8,128], index: 3, kind: output, shape index: {}]
  %s4 = sld [smem:[#allocation0]]
  $region30: #{tpu_custom_call.1} parent=0
    _
  %s6 = ssub.s32 1, %s4
  %s7 = scalar_select 0, %s6, %s4
  $region1: #{tpu_custom_call.1} parent=0
    #allocation2 [shape = 'u8[4096]{0}', space=vmem, size = 0x1000, scoped, tag = 'input window, operand 0, single buffered']
    #allocation3 [shape = 's32[1]{0}', space=sflag, size = 0x4, scoped, tag = 'scoped memory for tpu_custom_call.1']
    #allocation4 [shape = 's32[1]{0}', space=sflag, size = 0x4, scoped, tag = 'scoped memory for tpu_custom_call.1']
    #allocation5 [shape = 'u8[8192]{0}', space=vmem, size = 0x2000, scoped, tag = 'input window, operand 1, single buffered']
    #allocation6 [shape = 's32[1]{0}', space=sflag, size = 0x4, scoped, tag = 'scoped memory for tpu_custom_call.1']
    #allocation7 [shape = 'u8[4096]{0}', space=vmem, size = 0x1000, scoped, tag = 'output window, operand 0, single buffered']
    %8 = vsyncpa [#allocation3], 0
    %9 = vsyncpa [#allocation6], 0
    %10 = vsyncpa [#allocation4], 0
    // Predicated region
    $region2: #{tpu_custom_call.1} parent=1 // pred_check
      _
    $region3: #{tpu_custom_call.1} parent=1 // pred_check_branch
      %12 = sbr.rel (0) target = $region5
    $region4: #{tpu_custom_call.1} parent=1 // pred_region
      %s14 = ssub.s32 128, 128
      %15 = vsyncadd [#allocation3], %s14
      %s17 = sshll.u32 [#allocation2], 4
      %s18 = int_to_ptr.vmem [resolvable:$true] %s17
      %20 = dma.hbm_to_vmem [thread:$0]  %s0, 128, %s18, [#allocation3]
    $region5: #{tpu_custom_call.1} parent=1 // pred_fallthru
      _
    // Predicated region
    $region6: #{tpu_custom_call.1} parent=1 // pred_check
      _
    $region7: #{tpu_custom_call.1} parent=1 // pred_check_branch
      %22 = sbr.rel (0) target = $region9
    $region8: #{tpu_custom_call.1} parent=1 // pred_region
      %s24 = ssub.s32 256, 256
      %25 = vsyncadd [#allocation6], %s24
      %s26 = sshll.u32 [#allocation5], 4
      %s27 = int_to_ptr.vmem [resolvable:$true] %s26
      %32 = dma.hbm_to_vmem [thread:$0]  %s1, 256, %s27, [#allocation6], 64, 64, 4
    $region9: #{tpu_custom_call.1} parent=1 // pred_fallthru
      _
    // Predicated region
    $region10: #{tpu_custom_call.1} parent=1 // pred_check
      _
    $region11: #{tpu_custom_call.1} parent=1 // pred_check_branch
      %34 = sbr.rel (0) target = $region13
    $region12: #{tpu_custom_call.1} parent=1 // pred_region
      _
    $region13: #{tpu_custom_call.1} parent=1 // pred_fallthru
      _
    // Predicated region
    $region14: #{tpu_custom_call.1} parent=1 // pred_check
      _
    $region15: #{tpu_custom_call.1} parent=1 // pred_check_branch
      %36 = sbr.rel (0) target = $region17
    $region16: #{tpu_custom_call.1} parent=1 // pred_region
      %37 = dma.done [#allocation3], 128
    $region17: #{tpu_custom_call.1} parent=1 // pred_fallthru
      _
    // Predicated region
    $region18: #{tpu_custom_call.1} parent=1 // pred_check
      _
    $region19: #{tpu_custom_call.1} parent=1 // pred_check_branch
      %39 = sbr.rel (0) target = $region21
    $region20: #{tpu_custom_call.1} parent=1 // pred_region
      %40 = dma.done [#allocation6], 256
    $region21: #{tpu_custom_call.1} parent=1 // pred_fallthru
      _
    %v42 = vld [vmem:[#allocation2] sm:$0xff]
    %v43 = vpack.c.bf16 %v42, %v42
    %v44 = vld [vmem:[#allocation5] sm:$0xf]
    %v45 = vld [vmem:[#allocation5 + $0x4] sm:$0xf]
    %v46 = vld [vmem:[#allocation5 + $0x8] sm:$0xf]
    %v47 = vld [vmem:[#allocation5 + $0xc] sm:$0xf]
    %v48 = vld [vmem:[%s2] sm:$0x1]
    %v50 = vlaneseq
    %v51 = vshrl.u32 %v50, 7
    %v52 = vsub.s32 0, %v51
    %v53 = vrot.slane %v48, %v52
    %v59 = vunpack.c.l.b16 %v44
    %v60 = vunpack.c.l.b16 %v45
    %v61 = vunpack.c.l.b16 %v46
    %v62 = vunpack.c.l.b16 %v47
    %v63 = vpack.c.b16 %v60, %v59
    %v64 = vpack.c.b16 %v62, %v61
    %vm67 = vcmask 261120
    %v69 = vsel %vm67, %v43, 0
    %71 = vmatprep.subr.bf16.mxu0 0
    %72 = vmatpush1.bf16.msra.mxu0 %v63
    %73 = vmatprep.subr.bf16.mxu0 0
    %74 = vmatpush1.bf16.msra.mxu0 %v64
    %75 = vmatprep.subr.bf16.mxu0 0
    %76 = vmatpush1.bf16.msra.mxu0 0
    %77 = vmatprep.subr.bf16.mxu0 0
    %78 = vmatpush1.bf16.msra.mxu0 0
    %79 = vmatprep.subr.bf16.mxu0 0
    %80 = vmatpush1.bf16.msra.mxu0 0
    %81 = vmatprep.subr.bf16.mxu0 0
    %82 = vmatpush1.bf16.msra.mxu0 0
    %83 = vmatprep.subr.bf16.mxu0 0
    %84 = vmatpush1.bf16.msra.mxu0 0
    %85 = vmatprep.subr.bf16.mxu0 0
    %86 = vmatpush1.bf16.msra.mxu0 0
    %87 = vmatprep.subr.bf16.mxu0 0
    %88 = vmatpush1.bf16.msra.mxu0 0
    %89 = vmatprep.subr.bf16.mxu0 0
    %90 = vmatpush1.bf16.msra.mxu0 0
    %91 = vmatprep.subr.bf16.mxu0 0
    %92 = vmatpush1.bf16.msra.mxu0 0
    %93 = vmatprep.subr.bf16.mxu0 0
    %94 = vmatpush1.bf16.msra.mxu0 0
    %95 = vmatprep.subr.bf16.mxu0 0
    %96 = vmatpush1.bf16.msra.mxu0 0
    %97 = vmatprep.subr.bf16.mxu0 0
    %98 = vmatpush1.bf16.msra.mxu0 0
    %99 = vmatprep.subr.bf16.mxu0 0
    %100 = vmatpush1.bf16.msra.mxu0 0
    %101 = vmatprep.subr.bf16.mxu0 0
    %102 = vmatpush1.bf16.msra.mxu0 0
    %103 = vmatprep.mubr.bf16.mxu0 0
    %104 = vmatmul.mubr.bf16.gmra.mrb[0].mxu0 %v69
    %v105 = vpop.f32.mrb[0].mxu0
    %v106 = vadd.f32 %v53, %v105
    %v107 = vpop.f32.mrb[0].mxu0
    %v108 = vpop.f32.mrb[0].mxu0
    %v109 = vpop.f32.mrb[0].mxu0
    %110 = vdwg.mxu0
    %111 = vst [vmem:[#allocation7] sm:$0xff] %v106
    // Predicated region
    $region22: #{tpu_custom_call.1} parent=1 // pred_check
      _
    $region23: #{tpu_custom_call.1} parent=1 // pred_check_branch
      %113 = sbr.rel (0) target = $region25
    $region24: #{tpu_custom_call.1} parent=1 // pred_region
      %s115 = ssub.s32 128, 128
      %116 = vsyncadd [#allocation4], %s115
      %s118 = sshll.u32 [#allocation7], 4
      %s119 = int_to_ptr.vmem [resolvable:$true] %s118
      %121 = dma.vmem_to_hbm [thread:$0]  %s119, 128, %s3, [#allocation4]
    $region25: #{tpu_custom_call.1} parent=1 // pred_fallthru
      _
    // Predicated region
    $region26: #{tpu_custom_call.1} parent=1 // pred_check
      _
    $region27: #{tpu_custom_call.1} parent=1 // pred_check_branch
      %123 = sbr.rel (0) target = $region29
    $region28: #{tpu_custom_call.1} parent=1 // pred_region
      %124 = dma.done [#allocation4], 128
    $region29: #{tpu_custom_call.1} parent=1 // pred_fallthru
      _
    %125 = vsyncpa [#allocation3], 1
    %126 = vsyncpa [#allocation6], 1
    %127 = vsyncpa [#allocation4], 1

</llo_original>
